<compile_context>
chip_gen: v6e
topology: v6e:2x2x1
jax: 0.10.0
libtpu: 0.0.40
codegen_flags: <defaults>
</compile_context>

<pallas_src>
import functools
import math

import jax
import jax.numpy as jnp
import numpy as np
from jax.experimental import pallas as pl
from jax.experimental.pallas import tpu as pltpu

LANES = 128      # lane-dense slab width
STEP_BLK = 8     # steps per grid block (sublane-aligned)


def _sched_kernel(state_ref, coef_ref, lr_ref, wd_ref, curr_ref, *, num_groups):
    """Per-block schedule update.

    state_ref (VMEM, (2, 128) f32): row 0 = lr_max (lanes < G), row 1 = wd.
    coef_ref  (VMEM, (TB, 128) f32): per-step coefficients in lanes 0..6:
        [lr_a, lr_b, wd_val, wd_upd, wd_curr, past_decay_flag, lr_end]
        lr_new = lr_a * lr_max + lr_b
        wd_new = wd_val where (wd_upd && wd != 0) else wd
    lr_ref   (VMEM, (TB, 128) f32): new lr per step (lanes < G meaningful).
    wd_ref   (VMEM, (TB, 128) f32): new wd per step (lanes < G meaningful).
    curr_ref (VMEM, (TB, 128) f32): lane 0 = lr_curr, lane 1 = wd_curr.
    """
    st = state_ref[...]                    # (2, 128): one partial vreg
    lr_max = st[0:1, :]                    # (1, 128)
    wd0 = st[1:2, :]                       # (1, 128)

    coef = coef_ref[...]                   # (TB, 128)
    lr_a = coef[:, 0:1]                    # (TB, 1) — lane bcast on idle XLU
    lr_b = coef[:, 1:2]
    wd_val = coef[:, 2:3]
    wd_upd = coef[:, 3:4]
    wd_cur = coef[:, 4:5]
    lr_ovr = coef[:, 5:6]                  # past-decay-end flag
    lr_end = coef[:, 6:7]

    lr_new = lr_a * lr_max + lr_b          # (TB, 128) single FMA
    wd_new = jnp.where(jnp.logical_and(wd_upd > 0.0, wd0 != 0.0),
                       wd_val, wd0)        # (TB, 128)

    lr_ref[...] = lr_new                   # full-lane unmasked stores
    wd_ref[...] = jnp.broadcast_to(wd_new, lr_new.shape)

    # "current" lr/wd the module would return/log — cross-lane max on the XLU.
    lane = jax.lax.broadcasted_iota(jnp.int32, lr_new.shape, 1)
    lr_masked = jnp.where(lane < num_groups, lr_new, 0.0)
    lr_mx = jnp.max(lr_masked, axis=1, keepdims=True)        # (TB, 1)
    lr_curr = jnp.where(lr_ovr > 0.0, lr_end, jnp.maximum(0.0, lr_mx))
    curr_ref[...] = jnp.where(lane == 0, lr_curr,
                              jnp.where(lane == 1, wd_cur, 0.0))


@functools.partial(
    jax.jit,
    static_argnames=("wu_steps", "wu_start", "dec_steps", "lr_end",
                     "wd_start", "wd_end"))
def opt_scheduler_v2_schedule(steps, lr_max, wd, *, wu_steps, wu_start,
                              dec_steps, lr_end, wd_start, wd_end):
    """Batched OptSchedulerV2.forward() for a vector of steps.

    Args:
      steps:  (T,) int32 — step indices to evaluate the schedule at.
      lr_max: (G,) float32 — per param-group 'lr_max'.
      wd:     (G,) float32 — per param-group current 'weight_decay'.
    Returns:
      (lr (T, G), wd (T, G), lr_curr (T,), wd_curr (T,))
    """
    T = steps.shape[0]
    G = lr_max.shape[0]
    t_pad = ((T + STEP_BLK - 1) // STEP_BLK) * STEP_BLK

    # ---- scalar schedule math: hoisted out of the kernel, fused by XLA ----
    stepf = steps.astype(jnp.float32)
    safe_wu = float(wu_steps) if wu_steps > 0 else 1.0    # guard 0/0 -> NaN
    safe_dec = float(dec_steps) if dec_steps > 0 else 1.0
    alpha = stepf / safe_wu
    dec_step = stepf - wu_steps
    cosf = 0.5 * (1.0 + jnp.cos(jnp.float32(math.pi) * dec_step / safe_dec))

    in_warmup = stepf <= wu_steps
    past_decay = dec_step >= dec_steps

    lr_a = jnp.where(in_warmup, alpha,
                     jnp.where(past_decay, 0.0, cosf))
    lr_b = jnp.where(in_warmup, wu_start * (1.0 - alpha),
                     jnp.where(past_decay, lr_end, lr_end * (1.0 - cosf)))
    wd_val = jnp.where(past_decay, wd_end, wd_end + (wd_start - wd_end) * cosf)
    wd_upd = jnp.where(in_warmup, 0.0, 1.0)
    wd_cur = jnp.where(in_warmup, wd_start, wd_val)
    lr_ovr = jnp.where(jnp.logical_and(jnp.logical_not(in_warmup), past_decay),
                       1.0, 0.0)
    lr_end_col = jnp.full_like(stepf, lr_end)

    coef_cols = jnp.stack(
        [lr_a, lr_b, wd_val, wd_upd, wd_cur, lr_ovr, lr_end_col],
        axis=1).astype(jnp.float32)                               # (T, 7)
    coef = jnp.zeros((t_pad, LANES), jnp.float32).at[:T, :7].set(coef_cols)

    # Lane-dense shared state slab: row 0 = lr_max, row 1 = wd.
    state = (jnp.zeros((2, LANES), jnp.float32)
             .at[0, :G].set(lr_max.astype(jnp.float32))
             .at[1, :G].set(wd.astype(jnp.float32)))

    lr_out, wd_out, curr_out = pl.pallas_call(
        functools.partial(_sched_kernel, num_groups=G),
        out_shape=(jax.ShapeDtypeStruct((t_pad, LANES), jnp.float32),
                   jax.ShapeDtypeStruct((t_pad, LANES), jnp.float32),
                   jax.ShapeDtypeStruct((t_pad, LANES), jnp.float32)),
        grid=(t_pad // STEP_BLK,),
        in_specs=[pl.BlockSpec((2, LANES), lambda t: (0, 0)),
                  pl.BlockSpec((STEP_BLK, LANES), lambda t: (t, 0))],
        out_specs=(pl.BlockSpec((STEP_BLK, LANES), lambda t: (t, 0)),
                   pl.BlockSpec((STEP_BLK, LANES), lambda t: (t, 0)),
                   pl.BlockSpec((STEP_BLK, LANES), lambda t: (t, 0))),
        compiler_params=pltpu.CompilerParams(
            dimension_semantics=("parallel",)),
    )(state, coef)

    return (lr_out[:T, :G], wd_out[:T, :G],
            curr_out[:T, 0], curr_out[:T, 1])


def opt_scheduler_v2_step(step, lr_max, wd, **hp):
    """Single-step convenience wrapper (API parity with module.forward)."""
    steps = jnp.asarray(step, jnp.int32).reshape(1)
    lr, wdn, lrc, wdc = opt_scheduler_v2_schedule(steps, lr_max, wd, **hp)
    return lr[0], wdn[0], lrc[0], wdc[0]


def _reference(step, lr_max, wd, wu_steps, wu_start, dec_steps, lr_end,
               wd_start, wd_end):
    lr_max = np.asarray(lr_max, np.float64)
    wd = np.asarray(wd, np.float64)
    if step <= wu_steps:
        alpha = step / float(wu_steps)
        lr_new = wu_start + alpha * (lr_max - wu_start)
        wd_new = wd.copy()
        return lr_new, wd_new, max(0.0, lr_new.max()), wd_start
    dec_step = step - wu_steps
    if dec_step >= dec_steps:
        lr_new = np.full_like(lr_max, lr_end)
        wd_new = np.where(wd != 0, wd_end, wd)
        return lr_new, wd_new, lr_end, wd_end
    cosf = 0.5 * (1 + math.cos(math.pi * dec_step / float(dec_steps)))
    lr_new = lr_end + (lr_max - lr_end) * cosf
    new_wd = wd_end + (wd_start - wd_end) * cosf
    wd_new = np.where(wd != 0, new_wd, wd)
    return lr_new, wd_new, max(0.0, lr_new.max()), new_wd


if __name__ == "__main__":
    key = jax.random.PRNGKey(0)
    G = 8  # number of optimizer param groups

    # Deterministic synthetic "optimizer state": per-group lr_max and wd.
    k1, k2 = jax.random.split(key)
    lr_max = (1e-3 * (0.5 + jax.random.uniform(k1, (G,)))).astype(jnp.float32)
    wd = (0.04 * (0.5 + jax.random.uniform(k2, (G,)))).astype(jnp.float32)
    wd = wd.at[0].set(0.0).at[3].set(0.0)  # some groups have weight_decay == 0

    hp = dict(wu_steps=5.0, wu_start=1e-6, dec_steps=20.0,
              lr_end=1e-5, wd_start=0.04, wd_end=0.4)

    ok = True

    # Batched path: the whole schedule (warm-up, cosine, past decay end) in
    # one pallas_call.
    steps = jnp.arange(1, 33, dtype=jnp.int32)   # 1..32
    lr_all, wd_all, lrc_all, wdc_all = opt_scheduler_v2_schedule(
        steps, lr_max, wd, **hp)
    jax.block_until_ready((lr_all, wd_all, lrc_all, wdc_all))

    for i, s in enumerate(np.asarray(steps)):
        r_lr, r_wd, r_lrc, r_wdc = _reference(
            int(s), np.asarray(lr_max), np.asarray(wd),
            hp["wu_steps"], hp["wu_start"], hp["dec_steps"], hp["lr_end"],
            hp["wd_start"], hp["wd_end"])
        ok &= np.allclose(np.asarray(lr_all[i]), r_lr, rtol=1e-3, atol=1e-7)
        ok &= np.allclose(np.asarray(wd_all[i]), r_wd, rtol=1e-3, atol=1e-7)
        ok &= np.allclose(float(lrc_all[i]), r_lrc, rtol=1e-3, atol=1e-7)
        ok &= np.allclose(float(wdc_all[i]), r_wdc, rtol=1e-3, atol=1e-7)

    # Single-step convenience path (API parity with module.forward()).
    lr1, wd1, lrc1, wdc1 = opt_scheduler_v2_step(12, lr_max, wd, **hp)
    jax.block_until_ready((lr1, wd1, lrc1, wdc1))
    r_lr, r_wd, r_lrc, r_wdc = _reference(
        12, np.asarray(lr_max), np.asarray(wd),
        hp["wu_steps"], hp["wu_start"], hp["dec_steps"], hp["lr_end"],
        hp["wd_start"], hp["wd_end"])
    ok &= np.allclose(np.asarray(lr1), r_lr, rtol=1e-3, atol=1e-7)
    ok &= np.allclose(np.asarray(wd1), r_wd, rtol=1e-3, atol=1e-7)
    ok &= np.allclose(float(lrc1), r_lrc, rtol=1e-3, atol=1e-7)
    ok &= np.allclose(float(wdc1), r_wdc, rtol=1e-3, atol=1e-7)

    if ok:
        print("KERNEL_OK")
    else:
        print("KERNEL_MISMATCH")
</pallas_src>

<mosaic_0001>
module attributes {stable_mosaic.version = 11 : i64} {
  func.func @_sched_kernel(%arg0: i32, %arg1: memref<2x128xf32, #tpu.memory_space<vmem>>, %arg2: memref<8x128xf32, #tpu.memory_space<vmem>>, %arg3: memref<8x128xf32, #tpu.memory_space<vmem>>, %arg4: memref<8x128xf32, #tpu.memory_space<vmem>>, %arg5: memref<8x128xf32, #tpu.memory_space<vmem>>) attributes {dimension_semantics = [#tpu.dimension_semantics<parallel>], iteration_bounds = array<i64: 4>, scalar_prefetch = 0 : i64, scratch_operands = 0 : i64, tpu.core_type = #tpu.core_type<tc>, window_params = [{pipeline_mode = #tpu.pipeline_mode<synchronous>, transform_indices = @transform_0, window_bounds = array<i64: 2, 128>}, {transform_indices = @transform_1, window_bounds = array<i64: 8, 128>}, {transform_indices = @transform_2, window_bounds = array<i64: 8, 128>}, {transform_indices = @transform_3, window_bounds = array<i64: 8, 128>}, {transform_indices = @transform_4, window_bounds = array<i64: 8, 128>}]} {
    %c0 = arith.constant 0 : index
    %c0_0 = arith.constant 0 : index
    %0 = vector.load %arg1[%c0, %c0_0] : memref<2x128xf32, #tpu.memory_space<vmem>>, vector<2x128xf32>
    %1 = vector.extract_strided_slice %0 {offsets = [0, 0], sizes = [1, 128], strides = [1, 1]} : vector<2x128xf32> to vector<1x128xf32>
    %2 = vector.extract_strided_slice %0 {offsets = [1, 0], sizes = [1, 128], strides = [1, 1]} : vector<2x128xf32> to vector<1x128xf32>
    %c0_1 = arith.constant 0 : index
    %c0_2 = arith.constant 0 : index
    %3 = vector.load %arg2[%c0_1, %c0_2] : memref<8x128xf32, #tpu.memory_space<vmem>>, vector<8x128xf32>
    %4 = vector.extract_strided_slice %3 {offsets = [0, 0], sizes = [8, 1], strides = [1, 1]} : vector<8x128xf32> to vector<8x1xf32>
    %5 = vector.extract_strided_slice %3 {offsets = [0, 1], sizes = [8, 1], strides = [1, 1]} : vector<8x128xf32> to vector<8x1xf32>
    %6 = vector.extract_strided_slice %3 {offsets = [0, 2], sizes = [8, 1], strides = [1, 1]} : vector<8x128xf32> to vector<8x1xf32>
    %7 = vector.extract_strided_slice %3 {offsets = [0, 3], sizes = [8, 1], strides = [1, 1]} : vector<8x128xf32> to vector<8x1xf32>
    %8 = vector.extract_strided_slice %3 {offsets = [0, 4], sizes = [8, 1], strides = [1, 1]} : vector<8x128xf32> to vector<8x1xf32>
    %9 = vector.extract_strided_slice %3 {offsets = [0, 5], sizes = [8, 1], strides = [1, 1]} : vector<8x128xf32> to vector<8x1xf32>
    %10 = vector.extract_strided_slice %3 {offsets = [0, 6], sizes = [8, 1], strides = [1, 1]} : vector<8x128xf32> to vector<8x1xf32>
    %11 = vector.broadcast %4 : vector<8x1xf32> to vector<8x128xf32>
    %12 = vector.broadcast %1 : vector<1x128xf32> to vector<8x128xf32>
    %13 = arith.mulf %11, %12 : vector<8x128xf32>
    %14 = vector.broadcast %5 : vector<8x1xf32> to vector<8x128xf32>
    %15 = arith.addf %13, %14 : vector<8x128xf32>
    %cst = arith.constant 0.000000e+00 : f32
    %16 = vector.broadcast %cst : f32 to vector<8x1xf32>
    %17 = arith.cmpf ogt, %7, %16 : vector<8x1xf32>
    %cst_3 = arith.constant 0.000000e+00 : f32
    %18 = vector.broadcast %cst_3 : f32 to vector<1x128xf32>
    %19 = arith.cmpf one, %2, %18 : vector<1x128xf32>
    %20 = vector.broadcast %17 : vector<8x1xi1> to vector<8x128xi1>
    %21 = vector.broadcast %19 : vector<1x128xi1> to vector<8x128xi1>
    %22 = arith.andi %20, %21 : vector<8x128xi1>
    %23 = vector.shape_cast %6 : vector<8x1xf32> to vector<8x1xf32>
    %24 = vector.broadcast %23 : vector<8x1xf32> to vector<8x128xf32>
    %25 = vector.shape_cast %2 : vector<1x128xf32> to vector<1x128xf32>
    %26 = vector.broadcast %25 : vector<1x128xf32> to vector<8x128xf32>
    %27 = arith.select %22, %24, %26 : vector<8x128xi1>, vector<8x128xf32>
    %c0_4 = arith.constant 0 : index
    %c0_5 = arith.constant 0 : index
    %28 = vector.load %arg3[%c0_4, %c0_5] : memref<8x128xf32, #tpu.memory_space<vmem>>, vector<8x128xf32>
    tpu.vector_store %arg3[%c0_4, %c0_5], %15 {strides = array<i32>} : memref<8x128xf32, #tpu.memory_space<vmem>>, vector<8x128xf32>,
    %c0_6 = arith.constant 0 : index
    %c0_7 = arith.constant 0 : index
    %29 = vector.load %arg4[%c0_6, %c0_7] : memref<8x128xf32, #tpu.memory_space<vmem>>, vector<8x128xf32>
    tpu.vector_store %arg4[%c0_6, %c0_7], %27 {strides = array<i32>} : memref<8x128xf32, #tpu.memory_space<vmem>>, vector<8x128xf32>,
    %30 = tpu.iota {dimensions = array<i32: 1>} : vector<8x128xi32>
    %c8_i32 = arith.constant 8 : i32
    %31 = vector.broadcast %c8_i32 : i32 to vector<8x128xi32>
    %32 = arith.cmpi slt, %30, %31 : vector<8x128xi32>
    %cst_8 = arith.constant 0.000000e+00 : f32
    %33 = vector.broadcast %cst_8 : f32 to vector<8x128xf32>
    %34 = arith.select %32, %15, %33 : vector<8x128xi1>, vector<8x128xf32>
    %cst_9 = arith.constant dense<0xFF800000> : vector<8xf32>
    %35 = vector.multi_reduction <maximumf>, %34, %cst_9 [1] : vector<8x128xf32> to vector<8xf32>
    %36 = vector.shape_cast %35 : vector<8xf32> to vector<8x1xf32>
    %cst_10 = arith.constant 0.000000e+00 : f32
    %37 = vector.broadcast %cst_10 : f32 to vector<8x1xf32>
    %38 = arith.cmpf ogt, %9, %37 : vector<8x1xf32>
    %cst_11 = arith.constant 0.000000e+00 : f32
    %39 = vector.broadcast %cst_11 : f32 to vector<8x1xf32>
    %40 = arith.maximumf %39, %36 : vector<8x1xf32>
    %41 = arith.select %38, %10, %40 : vector<8x1xi1>, vector<8x1xf32>
    %c0_i32 = arith.constant 0 : i32
    %42 = vector.broadcast %c0_i32 : i32 to vector<8x128xi32>
    %43 = arith.cmpi eq, %30, %42 : vector<8x128xi32>
    %c1_i32 = arith.constant 1 : i32
    %44 = vector.broadcast %c1_i32 : i32 to vector<8x128xi32>
    %45 = arith.cmpi eq, %30, %44 : vector<8x128xi32>
    %cst_12 = arith.constant 0.000000e+00 : f32
    %46 = vector.shape_cast %8 : vector<8x1xf32> to vector<8x1xf32>
    %47 = vector.broadcast %46 : vector<8x1xf32> to vector<8x128xf32>
    %48 = vector.broadcast %cst_12 : f32 to vector<8x128xf32>
    %49 = arith.select %45, %47, %48 : vector<8x128xi1>, vector<8x128xf32>
    %50 = vector.shape_cast %41 : vector<8x1xf32> to vector<8x1xf32>
    %51 = vector.broadcast %50 : vector<8x1xf32> to vector<8x128xf32>
    %52 = arith.select %43, %51, %49 : vector<8x128xi1>, vector<8x128xf32>
    %c0_13 = arith.constant 0 : index
    %c0_14 = arith.constant 0 : index
    %53 = vector.load %arg5[%c0_13, %c0_14] : memref<8x128xf32, #tpu.memory_space<vmem>>, vector<8x128xf32>
    tpu.vector_store %arg5[%c0_13, %c0_14], %52 {strides = array<i32>} : memref<8x128xf32, #tpu.memory_space<vmem>>, vector<8x128xf32>,
    return
  }
  func.func @transform_0(%arg0: i32) -> (i32, i32) {
    %c0_i32 = arith.constant 0 : i32
    %c0_i32_0 = arith.constant 0 : i32
    %c0_i32_1 = arith.constant 0 : i32
    return %c0_i32, %c0_i32_0 : i32, i32
  }
  func.func @transform_1(%arg0: i32) -> (i32, i32) {
    %c0_i32 = arith.constant 0 : i32
    %c0_i32_0 = arith.constant 0 : i32
    return %arg0, %c0_i32 : i32, i32
  }
  func.func @transform_2(%arg0: i32) -> (i32, i32) {
    %c0_i32 = arith.constant 0 : i32
    %c0_i32_0 = arith.constant 0 : i32
    return %arg0, %c0_i32 : i32, i32
  }
  func.func @transform_3(%arg0: i32) -> (i32, i32) {
    %c0_i32 = arith.constant 0 : i32
    %c0_i32_0 = arith.constant 0 : i32
    return %arg0, %c0_i32 : i32, i32
  }
  func.func @transform_4(%arg0: i32) -> (i32, i32) {
    %c0_i32 = arith.constant 0 : i32
    %c0_i32_0 = arith.constant 0 : i32
    return %arg0, %c0_i32 : i32, i32
  }
}

</mosaic_0001>

<llo_original>
// kernel: opt_scheduler_v2_schedule.1
$region0: #{opt_scheduler_v2_schedule.1}
  #allocation0 [shape = 'u32[]', space=smem, size = 0x4, offset = 0x4, fixed_abs, tag = 'smem constant byte address 0x4 - core index']
  #allocation1 [shape = 'u32[144,128]{1,0:T(1,128)}', space=vmem, size = 0x12000, scoped, tag = 'internal scratch']
  %s0 = inlined_call_operand.vmem [shape: f32[2,128], index: 0, kind: input, shape index: {}]
  %s1 = inlined_call_operand.vmem [shape: f32[32,128], index: 1, kind: input, shape index: {}]
  %s2 = inlined_call_operand.vmem [shape: f32[32,128], index: 2, kind: output, shape index: {0}]
  %s3 = inlined_call_operand.vmem [shape: f32[32,128], index: 3, kind: output, shape index: {1}]
  %s4 = inlined_call_operand.vmem [shape: f32[32,128], index: 4, kind: output, shape index: {2}]
  %5 = xla_tuple %s2, %s3, %s4
  %s6 = sld [smem:[#allocation0]]
  $region57: #{opt_scheduler_v2_schedule.1} parent=0
    _
  %s8 = ssub.s32 1, %s6
  %s9 = scalar_select 0, %s8, %s6
  loop: start=0, step=1, limit=6
  $region2: #{opt_scheduler_v2_schedule.1} parent=0 // loop_pre_header
    _
  $region3: #{opt_scheduler_v2_schedule.1} parent=0 // loop_header
    %s11 = sphi 0, %s15
    %p12 = scmp.ge.s32.totalorder %s11, 6
    %s19 = sphi 0, %s19
    %s21 = sphi 0, %s19
    %s22 = sphi 0, %s21
    %s36 = sphi 0, %s22
    %s42 = sphi 0, %s44
    %s45 = sphi 0, %s42
    %s46 = sphi 0, %s45
    %s62 = sphi 0, %s46
    %s68 = sphi 0, %s70
    %s71 = sphi 0, %s68
    %s72 = sphi 0, %s71
    %s88 = sphi 0, %s72
    %s94 = sphi 0, %s96
    %s97 = sphi 0, %s94
    %s98 = sphi 0, %s97
    %s114 = sphi 0, %s98
    %s120 = sphi 0, %s122
    %s123 = sphi 0, %s120
    %s124 = sphi 0, %s123
    %s140 = sphi 0, %s124
  $region4: #{opt_scheduler_v2_schedule.1} parent=0 // loop_header_branch
    %14 = sbr.rel (%p12) target = $region8
  $region5: #{opt_scheduler_v2_schedule.1} parent=0 // loop_body
    %s16 = ssub.s32 %s11, 1
    %s17 = ssub.s32 %s11, 2
    %s18 = sadd.s32 %s11, 1
    %s20 = sadd.s32 %s19, 1
    %p23 = scmp.eq.s32.totalorder %s11, 3
    %p24 = scmp.ne.s32.totalorder %s19, %s21
    %p25 = scmp.eq.s32.totalorder %s11, 0
    %p26 = por %p24, %p25
    %p27 = scmp.ne.s32.totalorder %s19, %s21
    %p28 = scmp.eq.s32.totalorder %s16, 3
    %p29 = por %p27, %p28
    %p30 = scmp.ne.s32.totalorder %s21, %s22
    %p31 = scmp.eq.s32.totalorder %s16, 0
    %p32 = por %p30, %p31
    %p33 = scmp.ne.s32.totalorder %s21, %s22
    %p34 = scmp.eq.s32.totalorder %s17, 3
    %p35 = por %p33, %p34
    %p37 = scmp.ne.s32.totalorder %s22, %s36
    %p38 = scmp.eq.s32.totalorder %s17, 0
    %p39 = por %p37, %p38
    %s40 = ssub.s32 %s11, %s18
    %p41 = scmp.eq.s32.totalorder %s40, 0
    %s43 = sadd.s32 %s42, 1
    %s44 = scalar_select %p41, %s42, %s43
    %p47 = pneg %p41
    %p48 = scmp.eq.s32.totalorder %s11, 3
    %p49 = por %p47, %p48
    %p50 = scmp.ne.s32.totalorder %s42, %s45
    %p51 = scmp.eq.s32.totalorder %s11, 0
    %p52 = por %p50, %p51
    %p53 = scmp.ne.s32.totalorder %s42, %s45
    %p54 = scmp.eq.s32.totalorder %s16, 3
    %p55 = por %p53, %p54
    %p56 = scmp.ne.s32.totalorder %s45, %s46
    %p57 = scmp.eq.s32.totalorder %s16, 0
    %p58 = por %p56, %p57
    %p59 = scmp.ne.s32.totalorder %s45, %s46
    %p60 = scmp.eq.s32.totalorder %s17, 3
    %p61 = por %p59, %p60
    %p63 = scmp.ne.s32.totalorder %s46, %s62
    %p64 = scmp.eq.s32.totalorder %s17, 0
    %p65 = por %p63, %p64
    %s66 = ssub.s32 %s11, %s18
    %p67 = scmp.eq.s32.totalorder %s66, 0
    %s69 = sadd.s32 %s68, 1
    %s70 = scalar_select %p67, %s68, %s69
    %p73 = pneg %p67
    %p74 = scmp.eq.s32.totalorder %s11, 3
    %p75 = por %p73, %p74
    %p76 = scmp.ne.s32.totalorder %s68, %s71
    %p77 = scmp.eq.s32.totalorder %s11, 0
    %p78 = por %p76, %p77
    %p79 = scmp.ne.s32.totalorder %s68, %s71
    %p80 = scmp.eq.s32.totalorder %s16, 3
    %p81 = por %p79, %p80
    %p82 = scmp.ne.s32.totalorder %s71, %s72
    %p83 = scmp.eq.s32.totalorder %s16, 0
    %p84 = por %p82, %p83
    %p85 = scmp.ne.s32.totalorder %s71, %s72
    %p86 = scmp.eq.s32.totalorder %s17, 3
    %p87 = por %p85, %p86
    %p89 = scmp.ne.s32.totalorder %s72, %s88
    %p90 = scmp.eq.s32.totalorder %s17, 0
    %p91 = por %p89, %p90
    %s92 = ssub.s32 %s11, %s18
    %p93 = scmp.eq.s32.totalorder %s92, 0
    %s95 = sadd.s32 %s94, 1
    %s96 = scalar_select %p93, %s94, %s95
    %p99 = pneg %p93
    %p100 = scmp.eq.s32.totalorder %s11, 3
    %p101 = por %p99, %p100
    %p102 = scmp.ne.s32.totalorder %s94, %s97
    %p103 = scmp.eq.s32.totalorder %s11, 0
    %p104 = por %p102, %p103
    %p105 = scmp.ne.s32.totalorder %s94, %s97
    %p106 = scmp.eq.s32.totalorder %s16, 3
    %p107 = por %p105, %p106
    %p108 = scmp.ne.s32.totalorder %s97, %s98
    %p109 = scmp.eq.s32.totalorder %s16, 0
    %p110 = por %p108, %p109
    %p111 = scmp.ne.s32.totalorder %s97, %s98
    %p112 = scmp.eq.s32.totalorder %s17, 3
    %p113 = por %p111, %p112
    %p115 = scmp.ne.s32.totalorder %s98, %s114
    %p116 = scmp.eq.s32.totalorder %s17, 0
    %p117 = por %p115, %p116
    %s118 = ssub.s32 %s11, %s18
    %p119 = scmp.eq.s32.totalorder %s118, 0
    %s121 = sadd.s32 %s120, 1
    %s122 = scalar_select %p119, %s120, %s121
    %p125 = pneg %p119
    %p126 = scmp.eq.s32.totalorder %s11, 3
    %p127 = por %p125, %p126
    %p128 = scmp.ne.s32.totalorder %s120, %s123
    %p129 = scmp.eq.s32.totalorder %s11, 0
    %p130 = por %p128, %p129
    %p131 = scmp.ne.s32.totalorder %s120, %s123
    %p132 = scmp.eq.s32.totalorder %s16, 3
    %p133 = por %p131, %p132
    %p134 = scmp.ne.s32.totalorder %s123, %s124
    %p135 = scmp.eq.s32.totalorder %s16, 0
    %p136 = por %p134, %p135
    %p137 = scmp.ne.s32.totalorder %s123, %s124
    %p138 = scmp.eq.s32.totalorder %s17, 3
    %p139 = por %p137, %p138
    %p141 = scmp.ne.s32.totalorder %s124, %s140
    %p142 = scmp.eq.s32.totalorder %s17, 0
    %p143 = por %p141, %p142
    %p144 = scmp.le.s32.totalorder 1, %s11
    %p145 = scmp.lt.s32.totalorder %s11, 5
    %p146 = pnand %p144, %p145
    %p147 = pneg %p146
    // Predicated region
    $region9: #{opt_scheduler_v2_schedule.1} parent=5 // pred_check
      _
    $region10: #{opt_scheduler_v2_schedule.1} parent=5 // pred_check_branch
      %149 = sbr.rel (%p146) target = $region12
    $region11: #{opt_scheduler_v2_schedule.1} parent=5 // pred_region
      %s150 = ssub.s32 %s11, 1
      // Predicated region
      $region13: #{opt_scheduler_v2_schedule.1} parent=11 // pred_check
        %p151 = pneg %p32
      $region14: #{opt_scheduler_v2_schedule.1} parent=11 // pred_check_branch
        %153 = sbr.rel (%p151) target = $region16
      $region15: #{opt_scheduler_v2_schedule.1} parent=11 // pred_region
        _
      $region16: #{opt_scheduler_v2_schedule.1} parent=11 // pred_fallthru
        _
    $region12: #{opt_scheduler_v2_schedule.1} parent=5 // pred_fallthru
      _
    %p154 = scmp.lt.s32.totalorder %s11, 4
    // Predicated region
    $region17: #{opt_scheduler_v2_schedule.1} parent=5 // pred_check
      %p155 = pneg %p154
    $region18: #{opt_scheduler_v2_schedule.1} parent=5 // pred_check_branch
      %157 = sbr.rel (%p155) target = $region20
    $region19: #{opt_scheduler_v2_schedule.1} parent=5 // pred_region
      // Predicated region
      $region21: #{opt_scheduler_v2_schedule.1} parent=19 // pred_check
        %p158 = pneg %p52
      $region22: #{opt_scheduler_v2_schedule.1} parent=19 // pred_check_branch
        %160 = sbr.rel (%p158) target = $region24
      $region23: #{opt_scheduler_v2_schedule.1} parent=19 // pred_region
        %p161 = scmp.lt.s32.totalorder %s11, 3
        %s162 = scalar_select %p161, %s11, 3
        %s163 = smul.addr %s162, 8
        %s164 = scalar_lea.vmem %s1, %s163
      $region24: #{opt_scheduler_v2_schedule.1} parent=19 // pred_fallthru
        _
    $region20: #{opt_scheduler_v2_schedule.1} parent=5 // pred_fallthru
      _
    %p165 = scmp.le.s32.totalorder 1, %s11
    %p166 = scmp.lt.s32.totalorder %s11, 5
    %p167 = pnand %p165, %p166
    %p168 = pneg %p167
    // Predicated region
    $region25: #{opt_scheduler_v2_schedule.1} parent=5 // pred_check
      _
    $region26: #{opt_scheduler_v2_schedule.1} parent=5 // pred_check_branch
      %170 = sbr.rel (%p167) target = $region28
    $region27: #{opt_scheduler_v2_schedule.1} parent=5 // pred_region
      %s171 = ssub.s32 %s11, 1
      %p172 = pneg %p32
      %p173 = pneg %p29
      %p174 = scmp.lt.s32.totalorder %s16, 3
      %s175 = scalar_select %p174, %s16, 3
      %s176 = smul.addr %s175, 8
      %s177 = scalar_lea.vmem %s1, %s176
      %p178 = pneg %p58
      %p179 = pneg %p55
      %p180 = pneg %p84
      %p181 = pneg %p81
      %p182 = scmp.lt.s32.totalorder %s16, 3
      %s183 = scalar_select %p182, %s16, 3
      %s184 = smul.addr %s183, 8
      %s185 = scalar_lea.vmem %s2, %s184
      %p186 = pneg %p110
      %p187 = pneg %p107
      %p188 = scmp.lt.s32.totalorder %s16, 3
      %s189 = scalar_select %p188, %s16, 3
      %s190 = smul.addr %s189, 8
      %s191 = scalar_lea.vmem %s3, %s190
      %p192 = pneg %p136
      %p193 = pneg %p133
      %p194 = scmp.lt.s32.totalorder %s16, 3
      %s195 = scalar_select %p194, %s16, 3
      %s196 = smul.addr %s195, 8
      %s197 = scalar_lea.vmem %s4, %s196
      %p198 = scmp.lt.s32.totalorder %s16, 3
      %s199 = scalar_select %p198, %s16, 3
      %s200 = smul.addr %s199, 8
      %s201 = scalar_lea.vmem %s1, %s200
      %p202 = scmp.lt.s32.totalorder %s16, 3
      %s203 = scalar_select %p202, %s16, 3
      %s204 = smul.addr %s203, 8
      %s205 = scalar_lea.vmem %s2, %s204
      %p206 = scmp.lt.s32.totalorder %s16, 3
      %s207 = scalar_select %p206, %s16, 3
      %s208 = smul.addr %s207, 8
      %s209 = scalar_lea.vmem %s3, %s208
      %p210 = scmp.lt.s32.totalorder %s16, 3
      %s211 = scalar_select %p210, %s16, 3
      %s212 = smul.addr %s211, 8
      %s213 = scalar_lea.vmem %s4, %s212
      %v214 = vld [vmem:[%s0] sm:$0x3]
      %v215 = vld [vmem:[%s201] sm:$0xff]
      %217 = vset.pattern.permute.xlu0 0
      %218 = vperm.xlu0 %217, %v215
      %v219 = vpop.permute.xlu0 %218
      %v221 = vlaneseq
      %v222 = vshrl.u32 %v221, 7
      %v223 = vsub.s32 0, %v222
      %v224 = vrot.slane %v214, %v223
      %v225 = vmul.f32 %v219, %v224
      %226 = vset.pattern.permute.xlu0 1
      %227 = vperm.xlu0 %226, %v215
      %v228 = vpop.permute.xlu0 %227
      %v230 = vadd.f32 %v225, %v228
      %vm231 = vcmp.gt.f32.partialorder %v215, 0.0
      %vm232 = vcmp.ne.f32.partialorder %v214, 0.0
      %v233 = vsel %vm231, 1, 0
      %234 = vset.pattern.permute.xlu0 3
      %235 = vperm.xlu0 %234, %v233
      %v236 = vpop.permute.xlu0 %235
      %vm237 = vcmp.eq.s32.totalorder %v236, 1
      %v238 = vsel %vm232, 1, 0
      %v239 = vlaneseq
      %v240 = vshrl.u32 %v239, 7
      %v241 = vsub.s32 1, %v240
      %v242 = vrot.slane %v238, %v241
      %vm243 = vcmp.eq.s32.totalorder %v242, 1
      %vm244 = vmand %vm237, %vm243
      %245 = vset.pattern.permute.xlu0 2
      %246 = vperm.xlu0 %245, %v215
      %v247 = vpop.permute.xlu0 %246
      %v249 = vlaneseq
      %v250 = vshrl.u32 %v249, 7
      %v251 = vsub.s32 1, %v250
      %v252 = vrot.slane %v214, %v251
      %v253 = vsel %vm244, %v247, %v252
      %254 = vst [vmem:[%s205] sm:$0xff] %v230
      %255 = vst [vmem:[%s209] sm:$0xff] %v253
      %v256 = vlaneseq
      %v257 = vand.u32 %v256, 127
      %vm258 = vcmp.lt.s32.totalorder %v257, 8
      %v259 = vsel %vm258, %v230, 0.0
      %260 = vmax.xlane.f32.xlu0 %v259
      %v261 = vpop.xlane.xlu0 %260
      %v262 = vmax.f32 %v261, 0.0
      %263 = vrot.lane.b32.xlu0 %v215, 127
      %v264 = vpop.permute.xlu0 %263
      %v266 = vsel %vm231, %v264, %v262
      %vm267 = vcmp.eq.s32.totalorder %v257, 0
      %vm268 = vcmp.eq.s32.totalorder %v257, 1
      %269 = vset.pattern.permute.xlu0 4
      %270 = vperm.xlu0 %269, %v215
      %v271 = vpop.permute.xlu0 %270
      %v273 = vsel %vm268, %v271, 0.0
      %275 = vset.pattern.permute.xlu0 5
      %276 = vperm.xlu0 %275, %v266
      %v277 = vpop.permute.xlu0 %276
      %v279 = vsel %vm267, %v277, %v273
      %280 = vst [vmem:[%s213] sm:$0xff] %v279
      %p281 = scmp.lt.s32.totalorder %s16, 3
      %s282 = scalar_select %p281, %s16, 3
      %s283 = smul.addr %s282, 8
      %s284 = scalar_lea.vmem %s2, %s283
      %p285 = scmp.lt.s32.totalorder %s16, 3
      %s286 = scalar_select %p285, %s16, 3
      %s287 = smul.addr %s286, 8
      %s288 = scalar_lea.vmem %s3, %s287
      %p289 = scmp.lt.s32.totalorder %s16, 3
      %s290 = scalar_select %p289, %s16, 3
      %s291 = smul.addr %s290, 8
      %s292 = scalar_lea.vmem %s4, %s291
      // Predicated region
      $region29: #{opt_scheduler_v2_schedule.1} parent=27 // pred_check
        %p293 = pneg %p81
      $region30: #{opt_scheduler_v2_schedule.1} parent=27 // pred_check_branch
        %295 = sbr.rel (%p293) target = $region32
      $region31: #{opt_scheduler_v2_schedule.1} parent=27 // pred_region
        _
      $region32: #{opt_scheduler_v2_schedule.1} parent=27 // pred_fallthru
        _
      // Predicated region
      $region33: #{opt_scheduler_v2_schedule.1} parent=27 // pred_check
        %p296 = pneg %p107
      $region34: #{opt_scheduler_v2_schedule.1} parent=27 // pred_check_branch
        %298 = sbr.rel (%p296) target = $region36
      $region35: #{opt_scheduler_v2_schedule.1} parent=27 // pred_region
        _
      $region36: #{opt_scheduler_v2_schedule.1} parent=27 // pred_fallthru
        _
      // Predicated region
      $region37: #{opt_scheduler_v2_schedule.1} parent=27 // pred_check
        %p299 = pneg %p133
      $region38: #{opt_scheduler_v2_schedule.1} parent=27 // pred_check_branch
        %301 = sbr.rel (%p299) target = $region40
      $region39: #{opt_scheduler_v2_schedule.1} parent=27 // pred_region
        _
      $region40: #{opt_scheduler_v2_schedule.1} parent=27 // pred_fallthru
        _
    $region28: #{opt_scheduler_v2_schedule.1} parent=5 // pred_fallthru
      _
    %p302 = scmp.le.s32.totalorder 2, %s11
    // Predicated region
    $region41: #{opt_scheduler_v2_schedule.1} parent=5 // pred_check
      %p303 = pneg %p302
    $region42: #{opt_scheduler_v2_schedule.1} parent=5 // pred_check_branch
      %305 = sbr.rel (%p303) target = $region44
    $region43: #{opt_scheduler_v2_schedule.1} parent=5 // pred_region
      %s306 = ssub.s32 %s11, 2
      // Predicated region
      $region45: #{opt_scheduler_v2_schedule.1} parent=43 // pred_check
        %p307 = pneg %p87
      $region46: #{opt_scheduler_v2_schedule.1} parent=43 // pred_check_branch
        %309 = sbr.rel (%p307) target = $region48
      $region47: #{opt_scheduler_v2_schedule.1} parent=43 // pred_region
        %p310 = scmp.lt.s32.totalorder %s17, 3
        %s311 = scalar_select %p310, %s17, 3
        %s312 = smul.addr %s311, 8
        %s313 = scalar_lea.vmem %s2, %s312
      $region48: #{opt_scheduler_v2_schedule.1} parent=43 // pred_fallthru
        _
      // Predicated region
      $region49: #{opt_scheduler_v2_schedule.1} parent=43 // pred_check
        %p314 = pneg %p113
      $region50: #{opt_scheduler_v2_schedule.1} parent=43 // pred_check_branch
        %316 = sbr.rel (%p314) target = $region52
      $region51: #{opt_scheduler_v2_schedule.1} parent=43 // pred_region
        %p317 = scmp.lt.s32.totalorder %s17, 3
        %s318 = scalar_select %p317, %s17, 3
        %s319 = smul.addr %s318, 8
        %s320 = scalar_lea.vmem %s3, %s319
      $region52: #{opt_scheduler_v2_schedule.1} parent=43 // pred_fallthru
        _
      // Predicated region
      $region53: #{opt_scheduler_v2_schedule.1} parent=43 // pred_check
        %p321 = pneg %p139
      $region54: #{opt_scheduler_v2_schedule.1} parent=43 // pred_check_branch
        %323 = sbr.rel (%p321) target = $region56
      $region55: #{opt_scheduler_v2_schedule.1} parent=43 // pred_region
        %p324 = scmp.lt.s32.totalorder %s17, 3
        %s325 = scalar_select %p324, %s17, 3
        %s326 = smul.addr %s325, 8
        %s327 = scalar_lea.vmem %s4, %s326
      $region56: #{opt_scheduler_v2_schedule.1} parent=43 // pred_fallthru
        _
    $region44: #{opt_scheduler_v2_schedule.1} parent=5 // pred_fallthru
      _
  $region6: #{opt_scheduler_v2_schedule.1} parent=0 // loop_footer
    %s15 = sadd.s32 1, %s11
  $region7: #{opt_scheduler_v2_schedule.1} parent=0 // loop_footer_branch
    %10 = sbr.rel target = $region3
  $region8: #{opt_scheduler_v2_schedule.1} parent=0 // loop_exit
    _

</llo_original>
